<compile_context>
chip_gen: v6e
topology: v6e:2x2x1
jax: 0.10.0
libtpu: 0.0.40
codegen_flags: <defaults>
</compile_context>

<pallas_src>
import functools
import math

import jax
import jax.numpy as jnp
from jax.experimental import pallas as pl
from jax.experimental.pallas import tpu as pltpu


# ---------------------------------------------------------------------------
# Kernels
# ---------------------------------------------------------------------------

def _packed_kernel(xk_ref, expand_ref, phase_ref, o_ref):
    """General / packed path.

    xk_ref:     (tile_r, k)  the k x-values feeding one packed output row
    expand_ref: (k, W)       block-diag of (freq*scale, freq*scale) per chunk
    phase_ref:  (1, W)       0 for the sin half, pi/2 for the cos half
    o_ref:      (tile_r, W)  W = k * size (lane-dense when k*size % 128 == 0)
    """
    # One-hot matmul does the x-broadcast + frequency multiply on the idle MXU
    # (each output element touches exactly one xk entry -> no accumulation
    # ordering issues). HIGHEST keeps full f32 precision.
    emb = jnp.dot(xk_ref[...], expand_ref[...],
                  preferred_element_type=jnp.float32,
                  precision=jax.lax.Precision.HIGHEST)
    # cos(t) == sin(t + pi/2): one full-width lane-dense store.
    o_ref[...] = jnp.sin(emb + phase_ref[...]).astype(o_ref.dtype)


def _half_split_kernel(x_ref, freqh_ref, o_ref, *, half):
    """size % 256 == 0 path: both half-stores are lane-aligned (half % 128 == 0).

    x_ref:     (tile_r, 1)
    freqh_ref: (1, half)   freq * scale
    o_ref:     (tile_r, 2*half)
    """
    t = x_ref[...] * freqh_ref[...]          # (tile_r, half), single multiply
    o_ref[:, :half] = jnp.sin(t).astype(o_ref.dtype)
    o_ref[:, half:] = jnp.cos(t).astype(o_ref.dtype)


# ---------------------------------------------------------------------------
# Wrapper
# ---------------------------------------------------------------------------

def _round_up(a: int, b: int) -> int:
    return -(-a // b) * b


def _choose_tile_rows(num_rows: int, width: int, x_cols: int) -> int:
    """Rows per grid step: multiple of 8, VMEM-bounded, and >= ~8 grid steps."""
    # Double-buffered output tile + double-buffered x tile (lane-padded).
    bytes_per_row = 2 * 4 * (width + max(128, _round_up(x_cols, 128)))
    vmem_budget = 8 * 1024 * 1024            # safe on v5e/v6e/v7x scoped limits
    cap = max(8, min(1024, (vmem_budget // bytes_per_row) // 8 * 8))
    # Aim for >= ~8 grid steps when there is enough work (v7x dual-TC split,
    # pipelined writeback); per-step overhead is only ~0.35 us.
    target = _round_up(pl.cdiv(num_rows, 8), 8)
    return max(8, min(cap, target))


def sinusoidal_embedding(x: jax.Array, size: int, scale: float = 1.0,
                         out_dtype=jnp.float32) -> jax.Array:
    """x: any shape -> out: x.shape + (size,) in `out_dtype` (f32 default)."""
    assert size % 2 == 0 and size >= 4, "size must be even and >= 4"
    half = size // 2

    orig_shape = x.shape
    x_flat = x.reshape(-1).astype(jnp.float32)
    n = x_flat.shape[0]

    # Hoisted frequency table, with `scale` folded in (computed once).
    coef = math.log(10000.0) / (half - 1)
    freq = jnp.exp(-coef * jnp.arange(half, dtype=jnp.float32)) * jnp.float32(scale)

    sem = pltpu.CompilerParams(dimension_semantics=("parallel",))

    if size % 256 == 0:
        # ---- lane-aligned half-split: no phase add, no duplicated multiply.
        rows = n
        tile_r = _choose_tile_rows(rows, size, 1)
        out = pl.pallas_call(
            functools.partial(_half_split_kernel, half=half),
            out_shape=jax.ShapeDtypeStruct((rows, size), out_dtype),
            grid_spec=pltpu.PrefetchScalarGridSpec(
                num_scalar_prefetch=0,
                grid=(pl.cdiv(rows, tile_r),),
                in_specs=[
                    pl.BlockSpec((tile_r, 1), lambda i: (i, 0)),
                    pl.BlockSpec((1, half), lambda i: (0, 0)),   # constant
                ],
                out_specs=pl.BlockSpec((tile_r, size), lambda i: (i, 0)),
            ),
            compiler_params=sem,
        )(x_flat.reshape(n, 1), freq.reshape(1, half))
    else:
        # ---- general path: pack k rows per output row so stores are
        # lane-dense whenever possible (k * size % 128 == 0).
        k = 128 // math.gcd(size, 128)
        if k > 1 and n % k != 0:
            # Ragged packing would need pad + a full-output slicing copy;
            # fall back to the unpacked (lane-sparse but copy-free) layout.
            k = 1
        rows, width = n // k, k * size

        freq_full = jnp.concatenate([freq, freq])                 # (size,)
        eye = jnp.eye(k, dtype=jnp.float32)
        # expand[j, j2*size + m] = freq_full[m] if j2 == j else 0
        expand = (eye[:, :, None] * freq_full[None, None, :]).reshape(k, width)
        phase = jnp.tile(
            jnp.concatenate([jnp.zeros((half,), jnp.float32),
                             jnp.full((half,), 0.5 * math.pi, jnp.float32)]),
            k).reshape(1, width)

        tile_r = _choose_tile_rows(rows, width, k)
        out = pl.pallas_call(
            _packed_kernel,
            out_shape=jax.ShapeDtypeStruct((rows, width), out_dtype),
            grid_spec=pltpu.PrefetchScalarGridSpec(
                num_scalar_prefetch=0,
                grid=(pl.cdiv(rows, tile_r),),
                in_specs=[
                    pl.BlockSpec((tile_r, k), lambda i: (i, 0)),
                    pl.BlockSpec((k, width), lambda i: (0, 0)),   # constant
                    pl.BlockSpec((1, width), lambda i: (0, 0)),   # constant
                ],
                out_specs=pl.BlockSpec((tile_r, width), lambda i: (i, 0)),
            ),
            compiler_params=sem,
        )(x_flat.reshape(rows, k), expand, phase)

    # (rows, width) has the same row-major HBM layout as (n, size): the
    # reshape back is layout-preserving (no slicing copy anywhere).
    return out.reshape(orig_shape + (size,))


# ---------------------------------------------------------------------------
# Pure-JAX reference + self-test
# ---------------------------------------------------------------------------

def _reference(x: jax.Array, size: int, scale: float = 1.0) -> jax.Array:
    x = x.astype(jnp.float32) * scale
    half = size // 2
    coef = math.log(10000.0) / (half - 1)
    freq = jnp.exp(-coef * jnp.arange(half, dtype=jnp.float32))
    emb = x[..., None] * freq
    return jnp.concatenate([jnp.sin(emb), jnp.cos(emb)], axis=-1)


if __name__ == "__main__":
    key = jax.random.PRNGKey(0)
    cases = [
        # (x shape, size, scale)
        ((64,), 32, 1.0),         # small size -> packed lane-dense path (k=4)
        ((2, 4, 16), 256, 0.3),   # size % 256 == 0 -> half-split path, nd input
        ((51,), 32, 1.0),         # ragged n -> unpacked fallback, masked last block
        ((40,), 128, 2.0),        # k = 1 general path, lane-dense width
    ]
    for idx, (shape, size, scale) in enumerate(cases):
        key, sub = jax.random.split(key)
        x = jax.random.normal(sub, shape, dtype=jnp.float32)
        out = jax.block_until_ready(sinusoidal_embedding(x, size, scale))
        ref = _reference(x, size, scale)
        assert out.shape == shape + (size,), f"case {idx}: bad shape {out.shape}"
        assert jnp.allclose(out, ref, atol=1e-5, rtol=1e-5), f"case {idx}: mismatch"
    print("KERNEL_OK")
</pallas_src>

<mosaic_0001>
module attributes {stable_mosaic.version = 11 : i64} {
  func.func @_packed_kernel(%arg0: i32, %arg1: memref<8x4xf32, #tpu.memory_space<vmem>>, %arg2: memref<4x128xf32, #tpu.memory_space<vmem>>, %arg3: memref<1x128xf32, #tpu.memory_space<vmem>>, %arg4: memref<8x128xf32, #tpu.memory_space<vmem>>) attributes {dimension_semantics = [#tpu.dimension_semantics<parallel>], iteration_bounds = array<i64: 2>, scalar_prefetch = 0 : i64, scratch_operands = 0 : i64, tpu.core_type = #tpu.core_type<tc>, window_params = [{transform_indices = @transform_0, window_bounds = array<i64: 8, 4>}, {pipeline_mode = #tpu.pipeline_mode<synchronous>, transform_indices = @transform_1, window_bounds = array<i64: 4, 128>}, {pipeline_mode = #tpu.pipeline_mode<synchronous>, transform_indices = @transform_2, window_bounds = array<i64: 1, 128>}, {transform_indices = @transform_3, window_bounds = array<i64: 8, 128>}]} {
    %c0 = arith.constant 0 : index
    %c0_0 = arith.constant 0 : index
    %0 = vector.load %arg1[%c0, %c0_0] : memref<8x4xf32, #tpu.memory_space<vmem>>, vector<8x4xf32>
    %c0_1 = arith.constant 0 : index
    %c0_2 = arith.constant 0 : index
    %1 = vector.load %arg2[%c0_1, %c0_2] : memref<4x128xf32, #tpu.memory_space<vmem>>, vector<4x128xf32>
    %cst = arith.constant dense<0.000000e+00> : vector<8x128xf32>
    %2 = tpu.matmul %0, %1, %cst {dimension_numbers = #tpu.dot_dimension_numbers<[1], [0], [0], [1], [0, 0, 1, 1], [], []>, precision = #tpu.contract_precision<fp32>} : vector<8x4xf32>, vector<4x128xf32>, vector<8x128xf32> -> vector<8x128xf32>
    %c0_3 = arith.constant 0 : index
    %c0_4 = arith.constant 0 : index
    %3 = vector.load %arg3[%c0_3, %c0_4] : memref<1x128xf32, #tpu.memory_space<vmem>>, vector<1x128xf32>
    %4 = vector.broadcast %3 : vector<1x128xf32> to vector<8x128xf32>
    %5 = arith.addf %2, %4 : vector<8x128xf32>
    %6 = math.sin %5 : vector<8x128xf32>
    %c0_5 = arith.constant 0 : index
    %c0_6 = arith.constant 0 : index
    %7 = vector.load %arg4[%c0_5, %c0_6] : memref<8x128xf32, #tpu.memory_space<vmem>>, vector<8x128xf32>
    tpu.vector_store %arg4[%c0_5, %c0_6], %6 {strides = array<i32>} : memref<8x128xf32, #tpu.memory_space<vmem>>, vector<8x128xf32>,
    return
  }
  func.func @transform_0(%arg0: i32) -> (i32, i32) {
    %c0_i32 = arith.constant 0 : i32
    %c0_i32_0 = arith.constant 0 : i32
    return %arg0, %c0_i32 : i32, i32
  }
  func.func @transform_1(%arg0: i32) -> (i32, i32) {
    %c0_i32 = arith.constant 0 : i32
    %c0_i32_0 = arith.constant 0 : i32
    %c0_i32_1 = arith.constant 0 : i32
    return %c0_i32, %c0_i32_0 : i32, i32
  }
  func.func @transform_2(%arg0: i32) -> (i32, i32) {
    %c0_i32 = arith.constant 0 : i32
    %c0_i32_0 = arith.constant 0 : i32
    %c0_i32_1 = arith.constant 0 : i32
    return %c0_i32, %c0_i32_0 : i32, i32
  }
  func.func @transform_3(%arg0: i32) -> (i32, i32) {
    %c0_i32 = arith.constant 0 : i32
    %c0_i32_0 = arith.constant 0 : i32
    return %arg0, %c0_i32 : i32, i32
  }
}

</mosaic_0001>

<llo_original>
// kernel: tpu_custom_call.1
$region0: #{tpu_custom_call.1}
  #allocation0 [shape = 'u32[]', space=smem, size = 0x4, offset = 0x4, fixed_abs, tag = 'smem constant byte address 0x4 - core index']
  #allocation1 [shape = 'u32[144,128]{1,0:T(1,128)}', space=vmem, size = 0x12000, scoped, tag = 'internal scratch']
  %s0 = inlined_call_operand.vmem [shape: f32[16,4], index: 0, kind: input, shape index: {}]
  %s1 = inlined_call_operand.vmem [shape: f32[4,128], index: 1, kind: input, shape index: {}]
  %s2 = inlined_call_operand.vmem [shape: f32[1,128], index: 2, kind: input, shape index: {}]
  %s3 = inlined_call_operand.hbm [shape: f32[16,128], index: 3, kind: output, shape index: {}]
  %s4 = sld [smem:[#allocation0]]
  $region45: #{tpu_custom_call.1} parent=0
    _
  %s6 = ssub.s32 1, %s4
  %s7 = scalar_select 0, %s6, %s4
  $region1: #{tpu_custom_call.1} parent=0
    #allocation2 [shape = 'u8[8192]{0}', space=vmem, size = 0x2000, scoped, tag = 'output window, operand 0']
    #allocation3 [shape = 's32[2]{0}', space=sflag, size = 0x8, scoped, tag = 'scoped memory for tpu_custom_call.1']
    %8 = vsyncpa [#allocation3], 0
    %s9 = scalar_lea.sflag [#allocation3], 1
    %10 = vsyncpa %s9, 0
    loop: start=0, step=1, limit=4
    $region2: #{tpu_custom_call.1} parent=1 // loop_pre_header
      _
    $region3: #{tpu_custom_call.1} parent=1 // loop_header
      %s12 = sphi 0, %s16
      %p13 = scmp.ge.s32.totalorder %s12, 4
      %s22 = sphi 0, %s24
      %s25 = sphi 0, %s22
      %s26 = sphi 0, %s25
      %s42 = sphi 0, %s26
      %s46 = sphi 0, %s46
      %s48 = sphi 0, %s46
      %s49 = sphi 0, %s48
      %s63 = sphi 0, %s49
      %s67 = sphi 0, %s67
      %s69 = sphi 0, %s67
      %s70 = sphi 0, %s69
      %s84 = sphi 0, %s70
      %s90 = sphi 0, %s92
      %s93 = sphi 0, %s90
      %s94 = sphi 0, %s93
      %s110 = sphi 0, %s94
    $region4: #{tpu_custom_call.1} parent=1 // loop_header_branch
      %15 = sbr.rel (%p13) target = $region8
    $region5: #{tpu_custom_call.1} parent=1 // loop_body
      %s17 = ssub.s32 %s12, 1
      %s18 = ssub.s32 %s12, 2
      %s19 = sadd.s32 %s12, 1
      %s20 = ssub.s32 %s12, %s19
      %p21 = scmp.eq.s32.totalorder %s20, 0
      %s23 = sadd.s32 %s22, 1
      %s24 = scalar_select %p21, %s22, %s23
      %p27 = pneg %p21
      %p28 = scmp.eq.s32.totalorder %s12, 1
      %p29 = por %p27, %p28
      %p30 = scmp.ne.s32.totalorder %s22, %s25
      %p31 = scmp.eq.s32.totalorder %s12, 0
      %p32 = por %p30, %p31
      %p33 = scmp.ne.s32.totalorder %s22, %s25
      %p34 = scmp.eq.s32.totalorder %s17, 1
      %p35 = por %p33, %p34
      %p36 = scmp.ne.s32.totalorder %s25, %s26
      %p37 = scmp.eq.s32.totalorder %s17, 0
      %p38 = por %p36, %p37
      %p39 = scmp.ne.s32.totalorder %s25, %s26
      %p40 = scmp.eq.s32.totalorder %s18, 1
      %p41 = por %p39, %p40
      %p43 = scmp.ne.s32.totalorder %s26, %s42
      %p44 = scmp.eq.s32.totalorder %s18, 0
      %p45 = por %p43, %p44
      %s47 = sadd.s32 %s46, 1
      %p50 = scmp.eq.s32.totalorder %s12, 1
      %p51 = scmp.ne.s32.totalorder %s46, %s48
      %p52 = scmp.eq.s32.totalorder %s12, 0
      %p53 = por %p51, %p52
      %p54 = scmp.ne.s32.totalorder %s46, %s48
      %p55 = scmp.eq.s32.totalorder %s17, 1
      %p56 = por %p54, %p55
      %p57 = scmp.ne.s32.totalorder %s48, %s49
      %p58 = scmp.eq.s32.totalorder %s17, 0
      %p59 = por %p57, %p58
      %p60 = scmp.ne.s32.totalorder %s48, %s49
      %p61 = scmp.eq.s32.totalorder %s18, 1
      %p62 = por %p60, %p61
      %p64 = scmp.ne.s32.totalorder %s49, %s63
      %p65 = scmp.eq.s32.totalorder %s18, 0
      %p66 = por %p64, %p65
      %s68 = sadd.s32 %s67, 1
      %p71 = scmp.eq.s32.totalorder %s12, 1
      %p72 = scmp.ne.s32.totalorder %s67, %s69
      %p73 = scmp.eq.s32.totalorder %s12, 0
      %p74 = por %p72, %p73
      %p75 = scmp.ne.s32.totalorder %s67, %s69
      %p76 = scmp.eq.s32.totalorder %s17, 1
      %p77 = por %p75, %p76
      %p78 = scmp.ne.s32.totalorder %s69, %s70
      %p79 = scmp.eq.s32.totalorder %s17, 0
      %p80 = por %p78, %p79
      %p81 = scmp.ne.s32.totalorder %s69, %s70
      %p82 = scmp.eq.s32.totalorder %s18, 1
      %p83 = por %p81, %p82
      %p85 = scmp.ne.s32.totalorder %s70, %s84
      %p86 = scmp.eq.s32.totalorder %s18, 0
      %p87 = por %p85, %p86
      %s88 = ssub.s32 %s12, %s19
      %p89 = scmp.eq.s32.totalorder %s88, 0
      %s91 = sadd.s32 %s90, 1
      %s92 = scalar_select %p89, %s90, %s91
      %p95 = pneg %p89
      %p96 = scmp.eq.s32.totalorder %s12, 1
      %p97 = por %p95, %p96
      %p98 = scmp.ne.s32.totalorder %s90, %s93
      %p99 = scmp.eq.s32.totalorder %s12, 0
      %p100 = por %p98, %p99
      %p101 = scmp.ne.s32.totalorder %s90, %s93
      %p102 = scmp.eq.s32.totalorder %s17, 1
      %p103 = por %p101, %p102
      %p104 = scmp.ne.s32.totalorder %s93, %s94
      %p105 = scmp.eq.s32.totalorder %s17, 0
      %p106 = por %p104, %p105
      %p107 = scmp.ne.s32.totalorder %s93, %s94
      %p108 = scmp.eq.s32.totalorder %s18, 1
      %p109 = por %p107, %p108
      %p111 = scmp.ne.s32.totalorder %s94, %s110
      %p112 = scmp.eq.s32.totalorder %s18, 0
      %p113 = por %p111, %p112
      %p114 = scmp.le.s32.totalorder 1, %s12
      %p115 = scmp.lt.s32.totalorder %s12, 3
      %p116 = pnand %p114, %p115
      %p117 = pneg %p116
      // Predicated region
      $region9: #{tpu_custom_call.1} parent=5 // pred_check
        _
      $region10: #{tpu_custom_call.1} parent=5 // pred_check_branch
        %119 = sbr.rel (%p116) target = $region12
      $region11: #{tpu_custom_call.1} parent=5 // pred_region
        %s120 = ssub.s32 %s12, 1
        // Predicated region
        $region13: #{tpu_custom_call.1} parent=11 // pred_check
          %p121 = pneg %p59
        $region14: #{tpu_custom_call.1} parent=11 // pred_check_branch
          %123 = sbr.rel (%p121) target = $region16
        $region15: #{tpu_custom_call.1} parent=11 // pred_region
          _
        $region16: #{tpu_custom_call.1} parent=11 // pred_fallthru
          _
        // Predicated region
        $region17: #{tpu_custom_call.1} parent=11 // pred_check
          %p124 = pneg %p80
        $region18: #{tpu_custom_call.1} parent=11 // pred_check_branch
          %126 = sbr.rel (%p124) target = $region20
        $region19: #{tpu_custom_call.1} parent=11 // pred_region
          _
        $region20: #{tpu_custom_call.1} parent=11 // pred_fallthru
          _
      $region12: #{tpu_custom_call.1} parent=5 // pred_fallthru
        _
      %p127 = scmp.lt.s32.totalorder %s12, 2
      // Predicated region
      $region21: #{tpu_custom_call.1} parent=5 // pred_check
        %p128 = pneg %p127
      $region22: #{tpu_custom_call.1} parent=5 // pred_check_branch
        %130 = sbr.rel (%p128) target = $region24
      $region23: #{tpu_custom_call.1} parent=5 // pred_region
        // Predicated region
        $region25: #{tpu_custom_call.1} parent=23 // pred_check
          %p131 = pneg %p32
        $region26: #{tpu_custom_call.1} parent=23 // pred_check_branch
          %133 = sbr.rel (%p131) target = $region28
        $region27: #{tpu_custom_call.1} parent=23 // pred_region
          %p134 = scmp.lt.s32.totalorder %s12, 1
          %s135 = scalar_select %p134, %s12, 1
          %s136 = smul.addr %s135, 8
          %s137 = scalar_lea.vmem %s0, %s136
        $region28: #{tpu_custom_call.1} parent=23 // pred_fallthru
          _
      $region24: #{tpu_custom_call.1} parent=5 // pred_fallthru
        _
      %p138 = scmp.le.s32.totalorder 1, %s12
      %p139 = scmp.lt.s32.totalorder %s12, 3
      %p140 = pnand %p138, %p139
      %p141 = pneg %p140
      // Predicated region
      $region29: #{tpu_custom_call.1} parent=5 // pred_check
        _
      $region30: #{tpu_custom_call.1} parent=5 // pred_check_branch
        %143 = sbr.rel (%p140) target = $region32
      $region31: #{tpu_custom_call.1} parent=5 // pred_region
        %s144 = ssub.s32 %s12, 1
        %p145 = scmp.lt.s32.totalorder %s17, 1
        %s146 = scalar_select %p145, %s17, 1
        %s147 = smul.addr %s146, 8
        %s148 = scalar_lea.vmem %s0, %s147
        %p149 = pneg %p38
        %p150 = pneg %p35
        %p151 = pneg %p59
        %p152 = pneg %p56
        %p153 = pneg %p80
        %p154 = pneg %p77
        %p155 = pneg %p106
        %p156 = pneg %p103
        %s157 = sand.u32 %s93, 1
        %s158 = scalar_lea.sflag [#allocation3], %s157
        %s159 = sand.u32 %s93, 1
        %s160 = smul.addr %s159, 8
        %s161 = scalar_lea.vmem [#allocation2], %s160
        %p162 = scmp.lt.s32.totalorder %s17, 1
        %s163 = scalar_select %p162, %s17, 1
        %s164 = smul.addr %s163, 8
        %s165 = scalar_lea.vmem %s0, %s164
        %v166 = vld [vmem:[%s165] sm:$0xff]
        %v167 = vld [vmem:[%s1] sm:$0xf]
        %v168 = vld [vmem:[%s2] sm:$0x1]
        %v170 = vlaneseq
        %v171 = vshrl.u32 %v170, 7
        %v172 = vsub.s32 0, %v171
        %v173 = vrot.slane %v168, %v172
        %vm175 = vcmask 31744
        %v177 = vsel %vm175, %v166, 0
        %vm179 = vcmask 1043456
        %v181 = vsel %vm179, %v167, 0
        %183 = vmatprep.subr.mxu0 0.0
        %184 = vmatpush1.msra.mxu0 0.0
        %185 = vmatprep.subr.mxu0 0.0
        %186 = vmatpush1.msra.mxu0 0.0
        %187 = vmatprep.subr.mxu0 0.0
        %188 = vmatpush1.msra.mxu0 0.0
        %189 = vmatprep.subr.mxu0 0.0
        %190 = vmatpush1.msra.mxu0 0.0
        %191 = vmatprep.subr.mxu0 0.0
        %192 = vmatpush1.msra.mxu0 0.0
        %193 = vmatprep.subr.mxu0 0.0
        %194 = vmatpush1.msra.mxu0 0.0
        %195 = vmatprep.subr.mxu0 0.0
        %196 = vmatpush1.msra.mxu0 0.0
        %197 = vmatprep.subr.mxu0 0.0
        %198 = vmatpush1.msra.mxu0 0.0
        %199 = vmatprep.subr.mxu0 0.0
        %200 = vmatpush1.msra.mxu0 0.0
        %201 = vmatprep.subr.mxu0 0.0
        %202 = vmatpush1.msra.mxu0 0.0
        %203 = vmatprep.subr.mxu0 0.0
        %204 = vmatpush1.msra.mxu0 0.0
        %205 = vmatprep.subr.mxu0 0.0
        %206 = vmatpush1.msra.mxu0 0.0
        %207 = vmatprep.subr.mxu0 0.0
        %208 = vmatpush1.msra.mxu0 0.0
        %209 = vmatprep.subr.mxu0 0.0
        %210 = vmatpush1.msra.mxu0 0.0
        %211 = vmatprep.subr.mxu0 0.0
        %212 = vmatpush1.msra.mxu0 0.0
        %213 = vmatprep.subr.mxu0 0.0
        %v214 = vand.u32 %v181, 4294901760
        %215 = vmatpush1.msra.mxu0 %v214
        %216 = vmatprep.subr.mxu0 0.0
        %217 = vmatpush2.msra.mxu0 0.0
        %218 = vmatprep.subr.mxu0 0.0
        %219 = vmatpush2.msra.mxu0 0.0
        %220 = vmatprep.subr.mxu0 0.0
        %221 = vmatpush2.msra.mxu0 0.0
        %222 = vmatprep.subr.mxu0 0.0
        %223 = vmatpush2.msra.mxu0 0.0
        %224 = vmatprep.subr.mxu0 0.0
        %225 = vmatpush2.msra.mxu0 0.0
        %226 = vmatprep.subr.mxu0 0.0
        %227 = vmatpush2.msra.mxu0 0.0
        %228 = vmatprep.subr.mxu0 0.0
        %229 = vmatpush2.msra.mxu0 0.0
        %230 = vmatprep.subr.mxu0 0.0
        %231 = vmatpush2.msra.mxu0 0.0
        %232 = vmatprep.subr.mxu0 0.0
        %233 = vmatpush2.msra.mxu0 0.0
        %234 = vmatprep.subr.mxu0 0.0
        %235 = vmatpush2.msra.mxu0 0.0
        %236 = vmatprep.subr.mxu0 0.0
        %237 = vmatpush2.msra.mxu0 0.0
        %238 = vmatprep.subr.mxu0 0.0
        %239 = vmatpush2.msra.mxu0 0.0
        %240 = vmatprep.subr.mxu0 0.0
        %241 = vmatpush2.msra.mxu0 0.0
        %242 = vmatprep.subr.mxu0 0.0
        %243 = vmatpush2.msra.mxu0 0.0
        %244 = vmatprep.subr.mxu0 0.0
        %245 = vmatpush2.msra.mxu0 0.0
        %246 = vmatprep.subr.mxu0 0.0
        %247 = vmatpush2.msra.mxu0 0.0
        %248 = vmatprep.mubr.f32.mxu0 0.0
        %v249 = vand.u32 %v177, 4294901760
        %v250 = vsub.f32 %v177, %v249
        %v251 = vand.u32 %v250, 4294901760
        %v252 = vsub.f32 %v250, %v251
        %v253 = vand.u32 %v252, 4294901760
        %254 = vmatmul.mubr.f32.gmra.mxu0 %v253
        %v255 = vpop.f32.mrf.mxu0
        %v256 = vadd.f32 %v173, %v255
        %v257 = vpop.f32.mrf.mxu0
        %258 = vdwg.mxu0
        %259 = vmatprep.subr.mxu0 0.0
        %260 = vmatpush1.msra.mxu0 0.0
        %261 = vmatprep.subr.mxu0 0.0
        %262 = vmatpush1.msra.mxu0 0.0
        %263 = vmatprep.subr.mxu0 0.0
        %264 = vmatpush1.msra.mxu0 0.0
        %265 = vmatprep.subr.mxu0 0.0
        %266 = vmatpush1.msra.mxu0 0.0
        %267 = vmatprep.subr.mxu0 0.0
        %268 = vmatpush1.msra.mxu0 0.0
        %269 = vmatprep.subr.mxu0 0.0
        %270 = vmatpush1.msra.mxu0 0.0
        %271 = vmatprep.subr.mxu0 0.0
        %272 = vmatpush1.msra.mxu0 0.0
        %273 = vmatprep.subr.mxu0 0.0
        %274 = vmatpush1.msra.mxu0 0.0
        %275 = vmatprep.subr.mxu0 0.0
        %276 = vmatpush1.msra.mxu0 0.0
        %277 = vmatprep.subr.mxu0 0.0
        %278 = vmatpush1.msra.mxu0 0.0
        %279 = vmatprep.subr.mxu0 0.0
        %280 = vmatpush1.msra.mxu0 0.0
        %281 = vmatprep.subr.mxu0 0.0
        %282 = vmatpush1.msra.mxu0 0.0
        %283 = vmatprep.subr.mxu0 0.0
        %284 = vmatpush1.msra.mxu0 0.0
        %285 = vmatprep.subr.mxu0 0.0
        %286 = vmatpush1.msra.mxu0 0.0
        %287 = vmatprep.subr.mxu0 0.0
        %288 = vmatpush1.msra.mxu0 0.0
        %289 = vmatprep.subr.mxu0 0.0
        %v290 = vand.u32 %v181, 4294901760
        %v291 = vsub.f32 %v181, %v290
        %v292 = vand.u32 %v291, 4294901760
        %v293 = vsub.f32 %v291, %v292
        %v294 = vand.u32 %v293, 4294901760
        %295 = vmatpush1.msra.mxu0 %v294
        %296 = vmatprep.subr.mxu0 0.0
        %297 = vmatpush2.msra.mxu0 0.0
        %298 = vmatprep.subr.mxu0 0.0
        %299 = vmatpush2.msra.mxu0 0.0
        %300 = vmatprep.subr.mxu0 0.0
        %301 = vmatpush2.msra.mxu0 0.0
        %302 = vmatprep.subr.mxu0 0.0
        %303 = vmatpush2.msra.mxu0 0.0
        %304 = vmatprep.subr.mxu0 0.0
        %305 = vmatpush2.msra.mxu0 0.0
        %306 = vmatprep.subr.mxu0 0.0
        %307 = vmatpush2.msra.mxu0 0.0
        %308 = vmatprep.subr.mxu0 0.0
        %309 = vmatpush2.msra.mxu0 0.0
        %310 = vmatprep.subr.mxu0 0.0
        %311 = vmatpush2.msra.mxu0 0.0
        %312 = vmatprep.subr.mxu0 0.0
        %313 = vmatpush2.msra.mxu0 0.0
        %314 = vmatprep.subr.mxu0 0.0
        %315 = vmatpush2.msra.mxu0 0.0
        %316 = vmatprep.subr.mxu0 0.0
        %317 = vmatpush2.msra.mxu0 0.0
        %318 = vmatprep.subr.mxu0 0.0
        %319 = vmatpush2.msra.mxu0 0.0
        %320 = vmatprep.subr.mxu0 0.0
        %321 = vmatpush2.msra.mxu0 0.0
        %322 = vmatprep.subr.mxu0 0.0
        %323 = vmatpush2.msra.mxu0 0.0
        %324 = vmatprep.subr.mxu0 0.0
        %325 = vmatpush2.msra.mxu0 0.0
        %326 = vmatprep.subr.mxu0 0.0
        %327 = vmatpush2.msra.mxu0 0.0
        %328 = vmatprep.mubr.f32.mxu0 0.0
        %v329 = vand.u32 %v177, 4294901760
        %330 = vmatmul.mubr.f32.gmra.mxu0 %v329
        %v331 = vpop.f32.mrf.mxu0
        %v332 = vadd.f32 %v256, %v331
        %v333 = vpop.f32.mrf.mxu0
        %334 = vdwg.mxu0
        %335 = vmatprep.subr.mxu0 0.0
        %336 = vmatpush1.msra.mxu0 0.0
        %337 = vmatprep.subr.mxu0 0.0
        %338 = vmatpush1.msra.mxu0 0.0
        %339 = vmatprep.subr.mxu0 0.0
        %340 = vmatpush1.msra.mxu0 0.0
        %341 = vmatprep.subr.mxu0 0.0
        %342 = vmatpush1.msra.mxu0 0.0
        %343 = vmatprep.subr.mxu0 0.0
        %344 = vmatpush1.msra.mxu0 0.0
        %345 = vmatprep.subr.mxu0 0.0
        %346 = vmatpush1.msra.mxu0 0.0
        %347 = vmatprep.subr.mxu0 0.0
        %348 = vmatpush1.msra.mxu0 0.0
        %349 = vmatprep.subr.mxu0 0.0
        %350 = vmatpush1.msra.mxu0 0.0
        %351 = vmatprep.subr.mxu0 0.0
        %352 = vmatpush1.msra.mxu0 0.0
        %353 = vmatprep.subr.mxu0 0.0
        %354 = vmatpush1.msra.mxu0 0.0
        %355 = vmatprep.subr.mxu0 0.0
        %356 = vmatpush1.msra.mxu0 0.0
        %357 = vmatprep.subr.mxu0 0.0
        %358 = vmatpush1.msra.mxu0 0.0
        %359 = vmatprep.subr.mxu0 0.0
        %360 = vmatpush1.msra.mxu0 0.0
        %361 = vmatprep.subr.mxu0 0.0
        %362 = vmatpush1.msra.mxu0 0.0
        %363 = vmatprep.subr.mxu0 0.0
        %364 = vmatpush1.msra.mxu0 0.0
        %365 = vmatprep.subr.mxu0 0.0
        %v366 = vand.u32 %v181, 4294901760
        %v367 = vsub.f32 %v181, %v366
        %368 = vmatpush1.msra.mxu0 %v367
        %369 = vmatprep.subr.mxu0 0.0
        %370 = vmatpush2.msra.mxu0 0.0
        %371 = vmatprep.subr.mxu0 0.0
        %372 = vmatpush2.msra.mxu0 0.0
        %373 = vmatprep.subr.mxu0 0.0
        %374 = vmatpush2.msra.mxu0 0.0
        %375 = vmatprep.subr.mxu0 0.0
        %376 = vmatpush2.msra.mxu0 0.0
        %377 = vmatprep.subr.mxu0 0.0
        %378 = vmatpush2.msra.mxu0 0.0
        %379 = vmatprep.subr.mxu0 0.0
        %380 = vmatpush2.msra.mxu0 0.0
        %381 = vmatprep.subr.mxu0 0.0
        %382 = vmatpush2.msra.mxu0 0.0
        %383 = vmatprep.subr.mxu0 0.0
        %384 = vmatpush2.msra.mxu0 0.0
        %385 = vmatprep.subr.mxu0 0.0
        %386 = vmatpush2.msra.mxu0 0.0
        %387 = vmatprep.subr.mxu0 0.0
        %388 = vmatpush2.msra.mxu0 0.0
        %389 = vmatprep.subr.mxu0 0.0
        %390 = vmatpush2.msra.mxu0 0.0
        %391 = vmatprep.subr.mxu0 0.0
        %392 = vmatpush2.msra.mxu0 0.0
        %393 = vmatprep.subr.mxu0 0.0
        %394 = vmatpush2.msra.mxu0 0.0
        %395 = vmatprep.subr.mxu0 0.0
        %396 = vmatpush2.msra.mxu0 0.0
        %397 = vmatprep.subr.mxu0 0.0
        %398 = vmatpush2.msra.mxu0 0.0
        %399 = vmatprep.subr.mxu0 0.0
        %400 = vmatpush2.msra.mxu0 0.0
        %401 = vmatprep.mubr.f32.mxu0 0.0
        %v402 = vand.u32 %v177, 4294901760
        %v403 = vsub.f32 %v177, %v402
        %404 = vmatmul.mubr.f32.gmra.mxu0 %v403
        %v405 = vpop.f32.mrf.mxu0
        %v406 = vadd.f32 %v332, %v405
        %v407 = vpop.f32.mrf.mxu0
        %408 = vdwg.mxu0
        %409 = vmatprep.subr.mxu0 0.0
        %410 = vmatpush1.msra.mxu0 0.0
        %411 = vmatprep.subr.mxu0 0.0
        %412 = vmatpush1.msra.mxu0 0.0
        %413 = vmatprep.subr.mxu0 0.0
        %414 = vmatpush1.msra.mxu0 0.0
        %415 = vmatprep.subr.mxu0 0.0
        %416 = vmatpush1.msra.mxu0 0.0
        %417 = vmatprep.subr.mxu0 0.0
        %418 = vmatpush1.msra.mxu0 0.0
        %419 = vmatprep.subr.mxu0 0.0
        %420 = vmatpush1.msra.mxu0 0.0
        %421 = vmatprep.subr.mxu0 0.0
        %422 = vmatpush1.msra.mxu0 0.0
        %423 = vmatprep.subr.mxu0 0.0
        %424 = vmatpush1.msra.mxu0 0.0
        %425 = vmatprep.subr.mxu0 0.0
        %426 = vmatpush1.msra.mxu0 0.0
        %427 = vmatprep.subr.mxu0 0.0
        %428 = vmatpush1.msra.mxu0 0.0
        %429 = vmatprep.subr.mxu0 0.0
        %430 = vmatpush1.msra.mxu0 0.0
        %431 = vmatprep.subr.mxu0 0.0
        %432 = vmatpush1.msra.mxu0 0.0
        %433 = vmatprep.subr.mxu0 0.0
        %434 = vmatpush1.msra.mxu0 0.0
        %435 = vmatprep.subr.mxu0 0.0
        %436 = vmatpush1.msra.mxu0 0.0
        %437 = vmatprep.subr.mxu0 0.0
        %438 = vmatpush1.msra.mxu0 0.0
        %439 = vmatprep.subr.mxu0 0.0
        %v440 = vand.u32 %v181, 4294901760
        %441 = vmatpush1.msra.mxu0 %v440
        %442 = vmatprep.subr.mxu0 0.0
        %443 = vmatpush2.msra.mxu0 0.0
        %444 = vmatprep.subr.mxu0 0.0
        %445 = vmatpush2.msra.mxu0 0.0
        %446 = vmatprep.subr.mxu0 0.0
        %447 = vmatpush2.msra.mxu0 0.0
        %448 = vmatprep.subr.mxu0 0.0
        %449 = vmatpush2.msra.mxu0 0.0
        %450 = vmatprep.subr.mxu0 0.0
        %451 = vmatpush2.msra.mxu0 0.0
        %452 = vmatprep.subr.mxu0 0.0
        %453 = vmatpush2.msra.mxu0 0.0
        %454 = vmatprep.subr.mxu0 0.0
        %455 = vmatpush2.msra.mxu0 0.0
        %456 = vmatprep.subr.mxu0 0.0
        %457 = vmatpush2.msra.mxu0 0.0
        %458 = vmatprep.subr.mxu0 0.0
        %459 = vmatpush2.msra.mxu0 0.0
        %460 = vmatprep.subr.mxu0 0.0
        %461 = vmatpush2.msra.mxu0 0.0
        %462 = vmatprep.subr.mxu0 0.0
        %463 = vmatpush2.msra.mxu0 0.0
        %464 = vmatprep.subr.mxu0 0.0
        %465 = vmatpush2.msra.mxu0 0.0
        %466 = vmatprep.subr.mxu0 0.0
        %467 = vmatpush2.msra.mxu0 0.0
        %468 = vmatprep.subr.mxu0 0.0
        %469 = vmatpush2.msra.mxu0 0.0
        %470 = vmatprep.subr.mxu0 0.0
        %471 = vmatpush2.msra.mxu0 0.0
        %472 = vmatprep.subr.mxu0 0.0
        %473 = vmatpush2.msra.mxu0 0.0
        %474 = vmatprep.mubr.f32.mxu0 0.0
        %v475 = vand.u32 %v177, 4294901760
        %v476 = vsub.f32 %v177, %v475
        %v477 = vand.u32 %v476, 4294901760
        %478 = vmatmul.mubr.f32.gmra.mxu0 %v477
        %v479 = vpop.f32.mrf.mxu0
        %v480 = vadd.f32 %v406, %v479
        %v481 = vpop.f32.mrf.mxu0
        %482 = vdwg.mxu0
        %483 = vmatprep.subr.mxu0 0.0
        %484 = vmatpush1.msra.mxu0 0.0
        %485 = vmatprep.subr.mxu0 0.0
        %486 = vmatpush1.msra.mxu0 0.0
        %487 = vmatprep.subr.mxu0 0.0
        %488 = vmatpush1.msra.mxu0 0.0
        %489 = vmatprep.subr.mxu0 0.0
        %490 = vmatpush1.msra.mxu0 0.0
        %491 = vmatprep.subr.mxu0 0.0
        %492 = vmatpush1.msra.mxu0 0.0
        %493 = vmatprep.subr.mxu0 0.0
        %494 = vmatpush1.msra.mxu0 0.0
        %495 = vmatprep.subr.mxu0 0.0
        %496 = vmatpush1.msra.mxu0 0.0
        %497 = vmatprep.subr.mxu0 0.0
        %498 = vmatpush1.msra.mxu0 0.0
        %499 = vmatprep.subr.mxu0 0.0
        %500 = vmatpush1.msra.mxu0 0.0
        %501 = vmatprep.subr.mxu0 0.0
        %502 = vmatpush1.msra.mxu0 0.0
        %503 = vmatprep.subr.mxu0 0.0
        %504 = vmatpush1.msra.mxu0 0.0
        %505 = vmatprep.subr.mxu0 0.0
        %506 = vmatpush1.msra.mxu0 0.0
        %507 = vmatprep.subr.mxu0 0.0
        %508 = vmatpush1.msra.mxu0 0.0
        %509 = vmatprep.subr.mxu0 0.0
        %510 = vmatpush1.msra.mxu0 0.0
        %511 = vmatprep.subr.mxu0 0.0
        %512 = vmatpush1.msra.mxu0 0.0
        %513 = vmatprep.subr.mxu0 0.0
        %v514 = vand.u32 %v181, 4294901760
        %v515 = vsub.f32 %v181, %v514
        %v516 = vand.u32 %v515, 4294901760
        %517 = vmatpush1.msra.mxu0 %v516
        %518 = vmatprep.subr.mxu0 0.0
        %519 = vmatpush2.msra.mxu0 0.0
        %520 = vmatprep.subr.mxu0 0.0
        %521 = vmatpush2.msra.mxu0 0.0
        %522 = vmatprep.subr.mxu0 0.0
        %523 = vmatpush2.msra.mxu0 0.0
        %524 = vmatprep.subr.mxu0 0.0
        %525 = vmatpush2.msra.mxu0 0.0
        %526 = vmatprep.subr.mxu0 0.0
        %527 = vmatpush2.msra.mxu0 0.0
        %528 = vmatprep.subr.mxu0 0.0
        %529 = vmatpush2.msra.mxu0 0.0
        %530 = vmatprep.subr.mxu0 0.0
        %531 = vmatpush2.msra.mxu0 0.0
        %532 = vmatprep.subr.mxu0 0.0
        %533 = vmatpush2.msra.mxu0 0.0
        %534 = vmatprep.subr.mxu0 0.0
        %535 = vmatpush2.msra.mxu0 0.0
        %536 = vmatprep.subr.mxu0 0.0
        %537 = vmatpush2.msra.mxu0 0.0
        %538 = vmatprep.subr.mxu0 0.0
        %539 = vmatpush2.msra.mxu0 0.0
        %540 = vmatprep.subr.mxu0 0.0
        %541 = vmatpush2.msra.mxu0 0.0
        %542 = vmatprep.subr.mxu0 0.0
        %543 = vmatpush2.msra.mxu0 0.0
        %544 = vmatprep.subr.mxu0 0.0
        %545 = vmatpush2.msra.mxu0 0.0
        %546 = vmatprep.subr.mxu0 0.0
        %547 = vmatpush2.msra.mxu0 0.0
        %548 = vmatprep.subr.mxu0 0.0
        %549 = vmatpush2.msra.mxu0 0.0
        %550 = vmatprep.mubr.f32.mxu0 0.0
        %v551 = vand.u32 %v177, 4294901760
        %552 = vmatmul.mubr.f32.gmra.mxu0 %v551
        %v553 = vpop.f32.mrf.mxu0
        %v554 = vadd.f32 %v480, %v553
        %v555 = vpop.f32.mrf.mxu0
        %556 = vdwg.mxu0
        %557 = vmatprep.subr.mxu0 0.0
        %558 = vmatpush1.msra.mxu0 0.0
        %559 = vmatprep.subr.mxu0 0.0
        %560 = vmatpush1.msra.mxu0 0.0
        %561 = vmatprep.subr.mxu0 0.0
        %562 = vmatpush1.msra.mxu0 0.0
        %563 = vmatprep.subr.mxu0 0.0
        %564 = vmatpush1.msra.mxu0 0.0
        %565 = vmatprep.subr.mxu0 0.0
        %566 = vmatpush1.msra.mxu0 0.0
        %567 = vmatprep.subr.mxu0 0.0
        %568 = vmatpush1.msra.mxu0 0.0
        %569 = vmatprep.subr.mxu0 0.0
        %570 = vmatpush1.msra.mxu0 0.0
        %571 = vmatprep.subr.mxu0 0.0
        %572 = vmatpush1.msra.mxu0 0.0
        %573 = vmatprep.subr.mxu0 0.0
        %574 = vmatpush1.msra.mxu0 0.0
        %575 = vmatprep.subr.mxu0 0.0
        %576 = vmatpush1.msra.mxu0 0.0
        %577 = vmatprep.subr.mxu0 0.0
        %578 = vmatpush1.msra.mxu0 0.0
        %579 = vmatprep.subr.mxu0 0.0
        %580 = vmatpush1.msra.mxu0 0.0
        %581 = vmatprep.subr.mxu0 0.0
        %582 = vmatpush1.msra.mxu0 0.0
        %583 = vmatprep.subr.mxu0 0.0
        %584 = vmatpush1.msra.mxu0 0.0
        %585 = vmatprep.subr.mxu0 0.0
        %586 = vmatpush1.msra.mxu0 0.0
        %587 = vmatprep.subr.mxu0 0.0
        %v588 = vand.u32 %v181, 4294901760
        %589 = vmatpush1.msra.mxu0 %v588
        %590 = vmatprep.subr.mxu0 0.0
        %591 = vmatpush2.msra.mxu0 0.0
        %592 = vmatprep.subr.mxu0 0.0
        %593 = vmatpush2.msra.mxu0 0.0
        %594 = vmatprep.subr.mxu0 0.0
        %595 = vmatpush2.msra.mxu0 0.0
        %596 = vmatprep.subr.mxu0 0.0
        %597 = vmatpush2.msra.mxu0 0.0
        %598 = vmatprep.subr.mxu0 0.0
        %599 = vmatpush2.msra.mxu0 0.0
        %600 = vmatprep.subr.mxu0 0.0
        %601 = vmatpush2.msra.mxu0 0.0
        %602 = vmatprep.subr.mxu0 0.0
        %603 = vmatpush2.msra.mxu0 0.0
        %604 = vmatprep.subr.mxu0 0.0
        %605 = vmatpush2.msra.mxu0 0.0
        %606 = vmatprep.subr.mxu0 0.0
        %607 = vmatpush2.msra.mxu0 0.0
        %608 = vmatprep.subr.mxu0 0.0
        %609 = vmatpush2.msra.mxu0 0.0
        %610 = vmatprep.subr.mxu0 0.0
        %611 = vmatpush2.msra.mxu0 0.0
        %612 = vmatprep.subr.mxu0 0.0
        %613 = vmatpush2.msra.mxu0 0.0
        %614 = vmatprep.subr.mxu0 0.0
        %615 = vmatpush2.msra.mxu0 0.0
        %616 = vmatprep.subr.mxu0 0.0
        %617 = vmatpush2.msra.mxu0 0.0
        %618 = vmatprep.subr.mxu0 0.0
        %619 = vmatpush2.msra.mxu0 0.0
        %620 = vmatprep.subr.mxu0 0.0
        %621 = vmatpush2.msra.mxu0 0.0
        %622 = vmatprep.mubr.f32.mxu0 0.0
        %v623 = vand.u32 %v177, 4294901760
        %624 = vmatmul.mubr.f32.gmra.mxu0 %v623
        %v625 = vpop.f32.mrf.mxu0
        %v626 = vadd.f32 %v554, %v625
        %v627 = vpop.f32.mrf.mxu0
        %628 = vdwg.mxu0
        %v629 = vand.u32 2147483647, %v626
        %vm630 = vcmp.le.f32.partialorder %v629, 0.7853982
        %vm631 = vcmp.lt.s32.totalorder %v626, 0
        %v632 = vand.u32 %v626, 2139095040
        %v633 = vshrl.u32 %v632, 23
        %v634 = vsub.s32 %v633, 127
        %v635 = vand.u32 2147483647, %v626
        %v636 = vand.u32 %v635, 8388607
        %v637 = vor.u32 %v636, 8388608
        %v638 = vsub.s32 0, %v637
        %v639 = vadd.s32 %v634, 1
        %vm640 = vcmp.gt.s32.totalorder %v639, 0
        %v641 = vsel %vm640, %v639, 0
        %v642 = vshrl.u32 %v641, 5
        %v643 = vand.u32 %v641, 31
        %v644 = vsub.s32 32, %v643
        %v645 = vshrl.u32 683565275, %v644
        %v646 = vshll.u32 683565275, %v643
        %v647 = vshrl.u32 2475754826, %v644
        %v648 = vor.u32 %v646, %v647
        %v649 = vshll.u32 2475754826, %v643
        %v650 = vshrl.u32 2131351028, %v644
        %v651 = vor.u32 %v649, %v650
        %v652 = vshll.u32 2131351028, %v643
        %v653 = vshrl.u32 2102212464, %v644
        %v654 = vor.u32 %v652, %v653
        %v655 = vshll.u32 2102212464, %v643
        %v656 = vshrl.u32 920167782, %v644
        %v657 = vor.u32 %v655, %v656
        %v658 = vshll.u32 920167782, %v643
        %v659 = vshrl.u32 1326507024, %v644
        %v660 = vor.u32 %v658, %v659
        %vm661 = vcmp.lt.s32.totalorder %v642, 1
        %vm662 = vcmp.lt.s32.totalorder %v642, 2
        %vm663 = vcmp.lt.s32.totalorder %v642, 3
        %vm664 = vcmp.lt.s32.totalorder %v642, 4
        %v665 = vsel %vm661, %v645, %v648
        %v666 = vsel %vm664, %v654, 2102212464
        %v667 = vsel %vm663, %v651, %v666
        %v668 = vsel %vm662, %v665, %v667
        %v669 = vsel %vm661, %v648, %v651
        %v670 = vsel %vm664, %v657, 920167782
        %v671 = vsel %vm663, %v654, %v670
        %v672 = vsel %vm662, %v669, %v671
        %v673 = vsel %vm661, %v651, %v654
        %v674 = vsel %vm664, %v660, 1326507024
        %v675 = vsel %vm663, %v657, %v674
        %v676 = vsel %vm662, %v673, %v675
        %v677 = vshll.u32 %v637, 8
        %v678 = vmul.u32.u64.compose %v677, %v676
        %v679 = vextract.low.u32 %v678
        %v680 = vextract.high.u32 %v678
        %v681 = vmul.u32.u64.compose %v677, %v672
        %v682 = vextract.low.u32 %v681
        %v683 = vextract.high.u32 %v681
        %v684 = vmul.u32 %v677, %v668
        %v685 = vadd.s32 %v680, %v682
        %vm686 = vc.u32 %v680, %v682
        %v687 = vadd.s32 %v683, 1
        %v688 = vsel %vm686, %v687, %v683
        %v689 = vadd.s32 %v684, %v688
        %v690 = vadd.s32 %v689, 536870912
        %v691 = vshrl.u32 %v690, 30
        %v692 = vshll.u32 %v691, 30
        %v693 = vsub.s32 %v689, %v692
        %vm694 = vcmp.lt.s32.totalorder %v693, 0
        %v695 = vsub.s32 0, %v693
        %v696 = vsel %vm694, %v695, %v693
        %v697 = vclz %v696
        %v698 = vsub.s32 %v697, 2
        %vm699 = vcmp.gt.s32.totalorder 0, %v698
        %v700 = vsel %vm699, 0, %v698
        %v701 = vsub.s32 32, %v700
        %v702 = vshll.u32 %v693, %v700
        %v703 = vshrl.u32 %v685, %v701
        %v704 = vor.u32 %v702, %v703
        %v705 = vsub.s32 4294967266, %v700
        %v706 = vadd.s32 %v705, 127
        %v707 = vshll.u32 %v706, 23
        %v708 = vor.u32 4788187, %v707
        %v709 = vand.u32 2147483647, %v708
        %v711 = vcvt.s32.f32 %v704
        %v712 = vmul.f32 %v711, %v709
        %v713 = vxor.u32 %v712, 2147483648
        %v714 = vsel %vm631, %v713, %v712
        %v715 = vsub.s32 4, %v691
        %v716 = vsel %vm631, %v715, %v691
        %v717 = vsel %vm630, %v626, %v714
        %v718 = vsel %vm630, 0, %v716
        %v719 = vcosq.f32.pop %v717
        %v720 = vsinq.f32.pop %v717
        %vm721 = vweird.f32 %v626
        %v722 = vadd.s32 %v718, 3
        %v723 = vand.u32 %v722, 3
        %vm724 = vcmp.lt.s32.totalorder %v723, 2
        %vm725 = vcmp.eq.s32.totalorder %v723, 0
        %v726 = vxor.u32 %v720, 2147483648
        %v727 = vsel %vm725, %v719, %v726
        %vm728 = vcmp.eq.s32.totalorder %v723, 2
        %v729 = vxor.u32 %v719, 2147483648
        %v730 = vsel %vm728, %v729, %v720
        %v731 = vsel %vm724, %v727, %v730
        %v732 = vsel %vm721, nan, %v731
        %733 = vst [vmem:[%s161] sm:$0xff] %v732
        %s734 = sand.u32 %s93, 1
        %s735 = scalar_lea.sflag [#allocation3], %s734
        %s736 = sand.u32 %s93, 1
        %s737 = smul.addr %s736, 8
        %s738 = scalar_lea.vmem [#allocation2], %s737
        // Predicated region
        $region33: #{tpu_custom_call.1} parent=31 // pred_check
          %p739 = pneg %p103
        $region34: #{tpu_custom_call.1} parent=31 // pred_check_branch
          %741 = sbr.rel (%p739) target = $region36
        $region35: #{tpu_custom_call.1} parent=31 // pred_region
          %s743 = ssub.s32 128, 128
          %744 = vsyncadd %s735, %s743
          %s745 = smul.addr %s17, 128
          %s746 = scalar_lea.hbm %s3, %s745
          %s748 = sshll.u32 %s738, 4
          %s749 = int_to_ptr.vmem [resolvable:$true] %s748
          %751 = dma.vmem_to_hbm [thread:$0]  %s749, 128, %s746, %s735
        $region36: #{tpu_custom_call.1} parent=31 // pred_fallthru
          _
      $region32: #{tpu_custom_call.1} parent=5 // pred_fallthru
        _
      %p752 = scmp.le.s32.totalorder 2, %s12
      // Predicated region
      $region37: #{tpu_custom_call.1} parent=5 // pred_check
        %p753 = pneg %p752
      $region38: #{tpu_custom_call.1} parent=5 // pred_check_branch
        %755 = sbr.rel (%p753) target = $region40
      $region39: #{tpu_custom_call.1} parent=5 // pred_region
        %s756 = ssub.s32 %s12, 2
        // Predicated region
        $region41: #{tpu_custom_call.1} parent=39 // pred_check
          %p757 = pneg %p109
        $region42: #{tpu_custom_call.1} parent=39 // pred_check_branch
          %759 = sbr.rel (%p757) target = $region44
        $region43: #{tpu_custom_call.1} parent=39 // pred_region
          %s760 = sand.u32 %s94, 1
          %s761 = scalar_lea.sflag [#allocation3], %s760
          %s762 = sand.u32 %s94, 1
          %s763 = smul.addr %s762, 8
          %s764 = scalar_lea.vmem [#allocation2], %s763
          %765 = dma.done %s761, 128
        $region44: #{tpu_custom_call.1} parent=39 // pred_fallthru
          _
      $region40: #{tpu_custom_call.1} parent=5 // pred_fallthru
        _
    $region6: #{tpu_custom_call.1} parent=1 // loop_footer
      %s16 = sadd.s32 1, %s12
    $region7: #{tpu_custom_call.1} parent=1 // loop_footer_branch
      %11 = sbr.rel target = $region3
    $region8: #{tpu_custom_call.1} parent=1 // loop_exit
      _
    %766 = vsyncpa [#allocation3], 1
    %s767 = scalar_lea.sflag [#allocation3], 1
    %768 = vsyncpa %s767, 1

</llo_original>
